<compile_context>
chip_gen: v7x
topology: tpu7x:2x2x1
jax: 0.10.0
libtpu: 0.0.40
codegen_flags: <defaults>
</compile_context>

<pallas_src>
import math

import jax
import jax.numpy as jnp
from jax.experimental import pallas as pl
from jax.experimental.pallas import tpu as pltpu


# ---------------------------------------------------------------------------
# Kernels
# ---------------------------------------------------------------------------

def _ica_kernel_single_k(idx_ref, x_ref, w_ref, o_ref):
    """K fits in one block: Y_tile = X_tile @ W_tile, no accumulator scratch.

    idx_ref is the scalar-prefetch layer index (consumed by the index_maps).
    """
    del idx_ref
    o_ref[...] = jnp.dot(
        x_ref[...], w_ref[...], preferred_element_type=jnp.float32
    ).astype(o_ref.dtype)


def _ica_kernel_multi_k(idx_ref, x_ref, w_ref, o_ref, acc_ref):
    """K-tiled path with a resident f32 VMEM accumulator.

    x_ref : (tm, tk) bf16/f32 activation tile.
    w_ref : (tk, tn) pre-transposed weight tile (contraction on RHS axis 0,
            so no XLU transpose is needed before the MXU push).
    """
    del idx_ref
    k = pl.program_id(2)
    p = jnp.dot(x_ref[...], w_ref[...], preferred_element_type=jnp.float32)

    @pl.when(k == 0)
    def _():
        acc_ref[...] = p          # assign (no zero-fill + RMW on first step)

    @pl.when(k != 0)
    def _():
        acc_ref[...] += p

    @pl.when(k == pl.num_programs(2) - 1)
    def _():
        o_ref[...] = acc_ref[...].astype(o_ref.dtype)


# ---------------------------------------------------------------------------
# Tile planning
# ---------------------------------------------------------------------------

def _vmem_capacity_bytes() -> int:
    try:
        return int(pltpu.get_tpu_info().vmem_capacity_bytes)
    except Exception:
        return 64 << 20  # conservative: v7x per-TensorCore VMEM


def _pick_tile(dim: int, preferred: int, align: int) -> int:
    """Aligned tile <= preferred; full extent if dim already fits (always legal).
    Non-dividing tiles are fine on M/N (edge output blocks are masked)."""
    if dim <= preferred:
        return dim
    return max(align, (preferred // align) * align)


def _pick_divisor_tile(dim: int, preferred: int, align: int) -> int:
    """Like _pick_tile but must DIVIDE dim (used for the K/reduction axis: a
    padded edge K-block would feed garbage into real accumulations)."""
    # TODO(synk): for awkward F with no good 128-multiple divisor this falls
    # back to the full K extent; a masked edge-K block would allow cdiv here.
    if dim <= preferred:
        return dim
    t = (preferred // align) * align
    while t >= align:
        if dim % t == 0:
            return t
        t -= align
    return dim


def _plan_tiles(B: int, F: int, in_sz: int, out_sz: int):
    """Pick (tm, tn, tk) under a generation-safe VMEM budget; return the
    explicit vmem_limit_bytes to request."""
    vmem_cap = _vmem_capacity_bytes()
    budget = min(24 << 20, vmem_cap // 3)   # safe on v5e/v6e (128 MiB) and v7x (64 MiB)
    m_align = 16                             # bf16 sublane packing (covers f32's 8)

    def working_set(tm, tn, tk):
        # 2x double-buffered inputs + 2x output buffers + f32 accumulator.
        return (2 * tm * tk * in_sz + 2 * tk * tn * in_sz
                + 2 * tm * tn * out_sz + tm * tn * 4)

    plan = None
    for tm_p, tn_p, tk_p in ((512, 1024, 1024), (256, 1024, 512), (256, 512, 512),
                             (128, 512, 256), (128, 256, 256), (64, 256, 128),
                             (32, 128, 128)):
        tm = _pick_tile(B, tm_p, m_align)
        tn = _pick_tile(F, tn_p, 128)
        tk = _pick_divisor_tile(F, tk_p, 128)
        ws = working_set(tm, tn, tk)
        plan = (tm, tn, tk, ws)
        if ws <= budget:
            break
    tm, tn, tk, ws = plan

    # v7x has 2 TensorCores fed only via "parallel" grid axes: if the (i, j)
    # grid collapsed to one block, split N so both cores get work.
    if pl.cdiv(B, tm) * pl.cdiv(F, tn) == 1 and F >= 256:
        tn = max(128, ((pl.cdiv(F, 2) + 127) // 128) * 128)
        ws = working_set(tm, tn, tk)

    vmem_limit = min(int(vmem_cap * 0.9), max(32 << 20, 2 * ws))
    return tm, tn, tk, vmem_limit


# ---------------------------------------------------------------------------
# Parameters
# ---------------------------------------------------------------------------

def init_ica_params(key: jax.Array, feats_size: int,
                    dtype=jnp.float32) -> jax.Array:
    """5 x Linear(F, F, bias=False) weights in PyTorch (out, in) layout,
    matching torch's default kaiming-uniform bound 1/sqrt(fan_in)."""
    bound = 1.0 / math.sqrt(feats_size)
    return jax.random.uniform(key, (5, feats_size, feats_size), dtype=dtype,
                              minval=-bound, maxval=bound)


def prepare_ica_weights(w_stacked: jax.Array,
                        compute_dtype=jnp.bfloat16) -> jax.Array:
    """One-time prep (outside the hot path): transpose each layer to
    (in_features, out_features) and cast to the MXU compute dtype.  The kernel
    then contracts on the RHS major axis (no per-tile XLU transpose) and moves
    half the weight bytes from HBM."""
    return jnp.swapaxes(w_stacked, 1, 2).astype(compute_dtype)


# ---------------------------------------------------------------------------
# Forward
# ---------------------------------------------------------------------------

def ica_forward(x: jax.Array, w_prepared: jax.Array, idx) -> jax.Array:
    """ICA.forward:  Y = X @ W_idx.T  ==  X @ w_prepared[idx].

    x          : (B, F) activations (any float dtype; cast to the weight
                 compute dtype for the MXU, f32 accumulation).
    w_prepared : (5, F, F) pre-transposed (in, out) weights from
                 prepare_ica_weights (typically bf16).
    idx        : python int or traced int32 scalar (dynamic selection OK).
    """
    B, F = x.shape
    L, Fi, Fo = w_prepared.shape
    assert (Fi, Fo) == (F, F)

    compute_dtype = w_prepared.dtype
    out_dtype = x.dtype
    x_c = x.astype(compute_dtype)

    in_sz = jnp.dtype(compute_dtype).itemsize
    out_sz = jnp.dtype(out_dtype).itemsize

    # Clamp idx so a bad layer index can never request an OOB HBM block.
    idx_arr = jnp.clip(jnp.asarray(idx, dtype=jnp.int32), 0, L - 1).reshape((1,))

    tm, tn, tk, vmem_limit = _plan_tiles(B, F, in_sz, out_sz)
    mt, nt, kt = pl.cdiv(B, tm), pl.cdiv(F, tn), pl.cdiv(F, tk)
    grid = (mt, nt, kt)
    single_k = kt == 1

    # Advisory cost: include X re-reads across N-blocks and W re-reads across
    # M-blocks (only layer `idx` of the weight stack is ever touched).
    cost = pl.CostEstimate(
        flops=2 * B * F * F,
        transcendentals=0,
        bytes_accessed=int(B * F * in_sz * nt + F * F * in_sz * mt
                           + B * F * out_sz),
    )

    in_specs = [
        # Activations: (tm, tk) tile at (i, k).
        pl.BlockSpec((tm, tk), lambda i, j, k, idx_ref: (i, k)),
        # Stacked pre-transposed weights: only layer idx_ref[0] is DMA'd;
        # the leading dim is squeezed so the kernel sees a (tk, tn) tile.
        pl.BlockSpec((None, tk, tn), lambda i, j, k, idx_ref: (idx_ref[0], k, j)),
    ]
    out_spec = pl.BlockSpec((tm, tn), lambda i, j, k, idx_ref: (i, j))

    kernel = _ica_kernel_single_k if single_k else _ica_kernel_multi_k
    scratch = [] if single_k else [pltpu.VMEM((tm, tn), jnp.float32)]

    return pl.pallas_call(
        kernel,
        out_shape=jax.ShapeDtypeStruct((B, F), out_dtype),
        grid_spec=pltpu.PrefetchScalarGridSpec(
            num_scalar_prefetch=1,
            grid=grid,
            in_specs=in_specs,
            out_specs=out_spec,
            scratch_shapes=scratch,
        ),
        compiler_params=pltpu.CompilerParams(
            dimension_semantics=("parallel", "parallel", "arbitrary"),
            vmem_limit_bytes=vmem_limit,
        ),
        cost_estimate=cost,
    )(idx_arr, x_c, w_prepared)


# ---------------------------------------------------------------------------
# Demo / correctness check
# ---------------------------------------------------------------------------

if __name__ == "__main__":
    feats_size = 32
    batch = 8
    idx = 2

    key = jax.random.PRNGKey(0)
    k_w, k_x = jax.random.split(key)

    w_stacked = init_ica_params(k_w, feats_size)       # (5, F, F) PyTorch layout, f32
    w_prepared = prepare_ica_weights(w_stacked)         # (5, F, F) (in, out), bf16
    x = jax.random.normal(k_x, (batch, feats_size), dtype=jnp.float32)

    # Dynamic (traced) layer index also works thanks to scalar prefetch.
    y = ica_forward(x, w_prepared, jnp.int32(idx))
    y = jax.block_until_ready(y)

    # Reference with matching numerics: bf16 operands, f32 accumulation.
    y_ref = jnp.dot(
        x.astype(jnp.bfloat16), w_stacked[idx].T.astype(jnp.bfloat16),
        preferred_element_type=jnp.float32,
    ).astype(x.dtype)

    assert y.shape == (batch, feats_size)
    assert jnp.allclose(y, y_ref, atol=2e-2, rtol=2e-2), float(
        jnp.max(jnp.abs(y - y_ref)))

    print("KERNEL_OK")
</pallas_src>

<mosaic_0001>
module attributes {stable_mosaic.version = 11 : i64} {
  func.func @_ica_kernel_single_k(%arg0: i32, %arg1: i32, %arg2: i32, %arg3: memref<1xi32, #tpu.memory_space<smem>>, %arg4: memref<8x32xbf16, #tpu.memory_space<vmem>>, %arg5: memref<1x32x32xbf16, #tpu.memory_space<vmem>>, %arg6: memref<8x32xf32, #tpu.memory_space<vmem>>) attributes {dimension_semantics = [#tpu.dimension_semantics<parallel>, #tpu.dimension_semantics<parallel>, #tpu.dimension_semantics<arbitrary>], iteration_bounds = array<i64: 1, 1, 1>, scalar_prefetch = 1 : i64, scratch_operands = 0 : i64, tpu.core_type = #tpu.core_type<tc>, window_params = [{transform_indices = @transform_0, window_bounds = array<i64: 8, 32>}, {transform_indices = @transform_1, window_bounds = array<i64: 1, 32, 32>}, {transform_indices = @transform_2, window_bounds = array<i64: 8, 32>}]} {
    %c0 = arith.constant 0 : index
    %c0_0 = arith.constant 0 : index
    %0 = vector.load %arg4[%c0, %c0_0] : memref<8x32xbf16, #tpu.memory_space<vmem>>, vector<8x32xbf16>
    %c0_1 = arith.constant 0 : index
    %c0_2 = arith.constant 0 : index
    %c0_3 = arith.constant 0 : index
    %1 = vector.load %arg5[%c0_1, %c0_2, %c0_3] : memref<1x32x32xbf16, #tpu.memory_space<vmem>>, vector<1x32x32xbf16>
    %2 = vector.shape_cast %1 : vector<1x32x32xbf16> to vector<32x32xbf16>
    %cst = arith.constant dense<0.000000e+00> : vector<8x32xf32>
    %3 = tpu.matmul %0, %2, %cst {dimension_numbers = #tpu.dot_dimension_numbers<[1], [0], [0], [1], [0, 0, 1, 1], [], []>} : vector<8x32xbf16>, vector<32x32xbf16>, vector<8x32xf32> -> vector<8x32xf32>
    %c0_4 = arith.constant 0 : index
    %c0_5 = arith.constant 0 : index
    %4 = vector.load %arg6[%c0_4, %c0_5] : memref<8x32xf32, #tpu.memory_space<vmem>>, vector<8x32xf32>
    tpu.vector_store %arg6[%c0_4, %c0_5], %3 {strides = array<i32>} : memref<8x32xf32, #tpu.memory_space<vmem>>, vector<8x32xf32>,
    return
  }
  func.func @transform_0(%arg0: i32, %arg1: i32, %arg2: i32, %arg3: memref<1xi32, #tpu.memory_space<smem>>) -> (i32, i32) {
    %c0_i32 = arith.constant 0 : i32
    return %arg0, %arg2 : i32, i32
  }
  func.func @transform_1(%arg0: i32, %arg1: i32, %arg2: i32, %arg3: memref<1xi32, #tpu.memory_space<smem>>) -> (i32, i32, i32) {
    %c0 = arith.constant 0 : index
    %0 = memref.load %arg3[%c0] : memref<1xi32, #tpu.memory_space<smem>>
    %c0_i32 = arith.constant 0 : i32
    return %0, %arg2, %arg1 : i32, i32, i32
  }
  func.func @transform_2(%arg0: i32, %arg1: i32, %arg2: i32, %arg3: memref<1xi32, #tpu.memory_space<smem>>) -> (i32, i32) {
    %c0_i32 = arith.constant 0 : i32
    return %arg0, %arg1 : i32, i32
  }
}

</mosaic_0001>

<llo_original>
// kernel: tpu_custom_call.1
$region0: #{tpu_custom_call.1}
  #allocation0 [shape = 'u32[]', space=smem, size = 0x4, offset = 0x4, fixed_abs, tag = 'smem constant byte address 0x4 - core index']
  #allocation1 [shape = 'u32[144,128]{1,0:T(1,128)}', space=vmem, size = 0x12000, scoped, tag = 'internal scratch']
  #allocation2 [shape = 's32[1]{0}', space=sflag, size = 0x4, scoped, tag = 'scoped memory for tpu_custom_call.1']
  #allocation3 [shape = 's32[1]{0:T(128)S(6)}', space=smem, size = 0x200, scoped, tag = 'prefetched SMEM operand 0']
  %s0 = inlined_call_operand.<no memory space> [shape: s32[1], index: 0, kind: input, shape index: {}]
  %s1 = inlined_call_operand.hbm [shape: bf16[8,32], index: 1, kind: input, shape index: {}]
  %s2 = inlined_call_operand.hbm [shape: bf16[5,32,32], index: 2, kind: input, shape index: {}]
  %s3 = inlined_call_operand.hbm [shape: f32[8,32], index: 3, kind: output, shape index: {}]
  %s4 = sld [smem:[#allocation0]]
  $region26: #{tpu_custom_call.1} parent=0
    _
  %s6 = ssub.s32 1, %s4
  %s7 = scalar_select 0, %s6, %s4
  %8 = sst [smem:[#allocation3]] %s0
  $region1: #{tpu_custom_call.1} parent=0
    #allocation4 [shape = 'u8[2048]{0}', space=vmem, size = 0x800, scoped, tag = 'input window, operand 1, single buffered']
    #allocation5 [shape = 's32[1]{0}', space=sflag, size = 0x4, scoped, tag = 'scoped memory for tpu_custom_call.1']
    #allocation6 [shape = 's32[1]{0}', space=sflag, size = 0x4, scoped, tag = 'scoped memory for tpu_custom_call.1']
    #allocation7 [shape = 'u8[8192]{0}', space=vmem, size = 0x2000, scoped, tag = 'input window, operand 2, single buffered']
    #allocation8 [shape = 's32[1]{0}', space=sflag, size = 0x4, scoped, tag = 'scoped memory for tpu_custom_call.1']
    #allocation9 [shape = 'u8[4096]{0}', space=vmem, size = 0x1000, scoped, tag = 'output window, operand 0, single buffered']
    %9 = vsyncpa [#allocation5], 0
    %10 = vsyncpa [#allocation8], 0
    %11 = vsyncpa [#allocation6], 0
    // Predicated region
    $region2: #{tpu_custom_call.1} parent=1 // pred_check
      _
    $region3: #{tpu_custom_call.1} parent=1 // pred_check_branch
      %13 = sbr.rel (0) target = $region5
    $region4: #{tpu_custom_call.1} parent=1 // pred_region
      %s15 = ssub.s32 64, 64
      %16 = vsyncadd [#allocation5], %s15
      %s18 = sshll.u32 [#allocation4], 4
      %s19 = int_to_ptr.vmem [resolvable:$true] %s18
      %21 = dma.hbm_to_vmem [thread:$0]  %s1, 64, %s19, [#allocation5]
    $region5: #{tpu_custom_call.1} parent=1 // pred_fallthru
      _
    // Predicated region
    $region6: #{tpu_custom_call.1} parent=1 // pred_check
      _
    $region7: #{tpu_custom_call.1} parent=1 // pred_check_branch
      %23 = sbr.rel (0) target = $region9
    $region8: #{tpu_custom_call.1} parent=1 // pred_region
      %s24 = sld [smem:[#allocation3]]
      %s26 = ssub.s32 256, 256
      %27 = vsyncadd [#allocation8], %s26
      %s28 = smul.addr %s24, 4
      %s29 = smul.addr %s28, 64
      %s30 = scalar_lea.hbm %s2, %s29
      %s31 = sshll.u32 [#allocation7], 4
      %s32 = int_to_ptr.vmem [resolvable:$true] %s31
      %37 = dma.hbm_to_vmem [thread:$0]  %s30, 256, %s32, [#allocation8], 64, 64, 4
    $region9: #{tpu_custom_call.1} parent=1 // pred_fallthru
      _
    // Predicated region
    $region10: #{tpu_custom_call.1} parent=1 // pred_check
      _
    $region11: #{tpu_custom_call.1} parent=1 // pred_check_branch
      %39 = sbr.rel (0) target = $region13
    $region12: #{tpu_custom_call.1} parent=1 // pred_region
      %40 = dma.done [#allocation5], 64
    $region13: #{tpu_custom_call.1} parent=1 // pred_fallthru
      _
    // Predicated region
    $region14: #{tpu_custom_call.1} parent=1 // pred_check
      _
    $region15: #{tpu_custom_call.1} parent=1 // pred_check_branch
      %42 = sbr.rel (0) target = $region17
    $region16: #{tpu_custom_call.1} parent=1 // pred_region
      %43 = dma.done [#allocation8], 256
    $region17: #{tpu_custom_call.1} parent=1 // pred_fallthru
      _
    %s44 = sld [smem:[#allocation3]]
    %v46 = vld [vmem:[#allocation4] sm:$0xf]
    %v47 = vld [vmem:[#allocation7] sm:$0xf]
    %v48 = vld [vmem:[#allocation7 + $0x4] sm:$0xf]
    %v49 = vld [vmem:[#allocation7 + $0x8] sm:$0xf]
    %v50 = vld [vmem:[#allocation7 + $0xc] sm:$0xf]
    %v55 = vunpack.c.l.b16 %v47
    %v56 = vunpack.c.l.b16 %v48
    %v57 = vunpack.c.l.b16 %v49
    %v58 = vunpack.c.l.b16 %v50
    %v59 = vpack.c.b16 %v56, %v55
    %v60 = vpack.c.b16 %v58, %v57
    %vm63 = vcmask 261120
    %v65 = vsel %vm63, %v46, 0
    %67 = vmatprep.subr.bf16.mxu0 0
    %68 = vmatpush1.bf16.msra.mxu0 %v59
    %69 = vmatprep.subr.bf16.mxu0 0
    %70 = vmatpush1.bf16.msra.mxu0 %v60
    %71 = vmatprep.subr.bf16.mxu0 0
    %72 = vmatpush1.bf16.msra.mxu0 0
    %73 = vmatprep.subr.bf16.mxu0 0
    %74 = vmatpush1.bf16.msra.mxu0 0
    %75 = vmatprep.subr.bf16.mxu0 0
    %76 = vmatpush1.bf16.msra.mxu0 0
    %77 = vmatprep.subr.bf16.mxu0 0
    %78 = vmatpush1.bf16.msra.mxu0 0
    %79 = vmatprep.subr.bf16.mxu0 0
    %80 = vmatpush1.bf16.msra.mxu0 0
    %81 = vmatprep.subr.bf16.mxu0 0
    %82 = vmatpush1.bf16.msra.mxu0 0
    %83 = vmatprep.subr.bf16.mxu0 0
    %84 = vmatpush1.bf16.msra.mxu0 0
    %85 = vmatprep.subr.bf16.mxu0 0
    %86 = vmatpush1.bf16.msra.mxu0 0
    %87 = vmatprep.subr.bf16.mxu0 0
    %88 = vmatpush1.bf16.msra.mxu0 0
    %89 = vmatprep.subr.bf16.mxu0 0
    %90 = vmatpush1.bf16.msra.mxu0 0
    %91 = vmatprep.subr.bf16.mxu0 0
    %92 = vmatpush1.bf16.msra.mxu0 0
    %93 = vmatprep.subr.bf16.mxu0 0
    %94 = vmatpush1.bf16.msra.mxu0 0
    %95 = vmatprep.subr.bf16.mxu0 0
    %96 = vmatpush1.bf16.msra.mxu0 0
    %97 = vmatprep.subr.bf16.mxu0 0
    %98 = vmatpush1.bf16.msra.mxu0 0
    %99 = vmatprep.mubr.bf16.mxu0 0
    %100 = vmatmul.mubr.bf16.gmra.mrb[0].mxu0 %v65
    %v101 = vpop.f32.mrb[0].mxu0
    %v102 = vadd.f32 0.0, %v101
    %v103 = vpop.f32.mrb[0].mxu0
    %v104 = vpop.f32.mrb[0].mxu0
    %v105 = vpop.f32.mrb[0].mxu0
    %106 = vdwg.mxu0
    %107 = vst.msk [vmem:[#allocation9] sm:$0xff] %vm63, %v102
    // Predicated region
    $region18: #{tpu_custom_call.1} parent=1 // pred_check
      _
    $region19: #{tpu_custom_call.1} parent=1 // pred_check_branch
      %109 = sbr.rel (0) target = $region21
    $region20: #{tpu_custom_call.1} parent=1 // pred_region
      %s111 = ssub.s32 128, 128
      %112 = vsyncadd [#allocation6], %s111
      %s114 = sshll.u32 [#allocation9], 4
      %s115 = int_to_ptr.vmem [resolvable:$true] %s114
      %117 = dma.vmem_to_hbm [thread:$0]  %s115, 128, %s3, [#allocation6]
    $region21: #{tpu_custom_call.1} parent=1 // pred_fallthru
      _
    // Predicated region
    $region22: #{tpu_custom_call.1} parent=1 // pred_check
      _
    $region23: #{tpu_custom_call.1} parent=1 // pred_check_branch
      %119 = sbr.rel (0) target = $region25
    $region24: #{tpu_custom_call.1} parent=1 // pred_region
      %120 = dma.done [#allocation6], 128
    $region25: #{tpu_custom_call.1} parent=1 // pred_fallthru
      _
    %121 = vsyncpa [#allocation5], 1
    %122 = vsyncpa [#allocation8], 1
    %123 = vsyncpa [#allocation6], 1

</llo_original>
